<compile_context>
chip_gen: v5e
topology: v5e:2x2
jax: 0.10.0
libtpu: 0.0.40
codegen_flags: <defaults>
</compile_context>

<pallas_src>
import jax
import jax.numpy as jnp
import numpy as np
from jax.experimental import pallas as pl
from jax.experimental.pallas import tpu as pltpu


def _copy_kernel(x_ref, o_ref):
    # Whole slab is resident in VMEM at these sizes; one unmasked load + store.
    o_ref[...] = x_ref[...]


def _resolve_size(size, total):
    """torch.Tensor.view() shape resolution (handles a single -1)."""
    size = tuple(int(s) for s in size)
    if size.count(-1) > 1:
        raise ValueError("only one dimension can be inferred")
    known = 1
    for s in size:
        if s != -1:
            known *= s
    if -1 in size:
        if known == 0 or total % known != 0:
            raise ValueError(f"shape {size} is invalid for input of size {total}")
        size = tuple(total // known if s == -1 else s for s in size)
    elif known != total:
        raise ValueError(f"shape {size} is invalid for input of size {total}")
    return size


def view_forward(x, size):
    """Pallas implementation of View(size).forward(x) == x.view(size)."""
    total = int(x.size)
    out_shape = _resolve_size(size, total)

    # Lane-dense slab layout for the copy: last dim a multiple of 128 when
    # possible (unmasked vst), otherwise a full-extent [1, N] row.
    if total % 128 == 0:
        slab = (total // 128, 128)
    else:
        slab = (1, total)

    # Metadata-only for a contiguous row-major array (same element order as
    # torch's .view on a contiguous tensor).
    x_slab = jnp.reshape(x, slab)

    out_slab = pl.pallas_call(
        _copy_kernel,
        out_shape=jax.ShapeDtypeStruct(slab, x.dtype),
        in_specs=[pl.BlockSpec(memory_space=pltpu.MemorySpace.VMEM)],
        out_specs=pl.BlockSpec(memory_space=pltpu.MemorySpace.VMEM),
    )(x_slab)

    return jnp.reshape(out_slab, out_shape)


def _reference(x, size):
    """Pure-JAX reference mirroring torch semantics: tensor.view(size)."""
    return jnp.reshape(x, _resolve_size(size, int(x.size)))


if __name__ == "__main__":
    # Typical CausalVAE usage: View((-1, C*H*W)) flattening conv features.
    B, C, H, W = 2, 4, 16, 16
    size = (-1, C * H * W)  # -> (2, 1024); 1024 is a multiple of 128 (lane-dense)

    key = jax.random.PRNGKey(0)
    x = jax.random.normal(key, (B, C, H, W), jnp.float32)

    out = view_forward(x, size)
    jax.block_until_ready(out)

    ref = _reference(x, size)
    assert out.shape == (B, C * H * W)
    np.testing.assert_allclose(np.asarray(out), np.asarray(ref), rtol=0, atol=0)
    print("KERNEL_OK")
</pallas_src>

<mosaic_0001>
module attributes {stable_mosaic.version = 11 : i64} {
  func.func @_copy_kernel(%arg0: memref<16x128xf32, #tpu.memory_space<vmem>>, %arg1: memref<16x128xf32, #tpu.memory_space<vmem>>) attributes {dimension_semantics = [], scalar_prefetch = 0 : i64, scratch_operands = 0 : i64, tpu.core_type = #tpu.core_type<tc>} {
    %c0 = arith.constant 0 : index
    %c0_0 = arith.constant 0 : index
    %0 = vector.load %arg0[%c0, %c0_0] : memref<16x128xf32, #tpu.memory_space<vmem>>, vector<16x128xf32>
    %c0_1 = arith.constant 0 : index
    %c0_2 = arith.constant 0 : index
    %1 = vector.load %arg1[%c0_1, %c0_2] : memref<16x128xf32, #tpu.memory_space<vmem>>, vector<16x128xf32>
    tpu.vector_store %arg1[%c0_1, %c0_2], %0 {strides = array<i32>} : memref<16x128xf32, #tpu.memory_space<vmem>>, vector<16x128xf32>,
    return
  }
}

</mosaic_0001>

<llo_original>
// kernel: tpu_custom_call.1
$region0: #{tpu_custom_call.1}
  #allocation0 [shape = 'u32[]', space=smem, size = 0x4, offset = 0x4, fixed_abs, tag = 'smem constant byte address 0x4 - core index']
  #allocation1 [shape = 'u32[72,128]{1,0:T(1,128)}', space=vmem, size = 0x9000, scoped, tag = 'internal scratch']
  %s0 = inlined_call_operand.hbm [shape: f32[16,128], index: 0, kind: input, shape index: {}]
  %s1 = inlined_call_operand.hbm [shape: f32[16,128], index: 1, kind: output, shape index: {}]
  %s2 = sld [smem:[#allocation0]]
  $region18: #{tpu_custom_call.1} parent=0
    _
  %s4 = ssub.s32 1, %s2
  %s5 = scalar_select 0, %s4, %s2
  $region1: #{tpu_custom_call.1} parent=0
    #allocation2 [shape = 'u8[8192]{0}', space=vmem, size = 0x2000, scoped, tag = 'input window, operand 0, single buffered']
    #allocation3 [shape = 's32[1]{0}', space=sflag, size = 0x4, scoped, tag = 'scoped memory for tpu_custom_call.1']
    #allocation4 [shape = 's32[1]{0}', space=sflag, size = 0x4, scoped, tag = 'scoped memory for tpu_custom_call.1']
    #allocation5 [shape = 'u8[8192]{0}', space=vmem, size = 0x2000, scoped, tag = 'output window, operand 0, single buffered']
    %6 = vsyncpa [#allocation3], 0
    %7 = vsyncpa [#allocation4], 0
    // Predicated region
    $region2: #{tpu_custom_call.1} parent=1 // pred_check
      _
    $region3: #{tpu_custom_call.1} parent=1 // pred_check_branch
      %9 = sbr.rel (0) target = $region5
    $region4: #{tpu_custom_call.1} parent=1 // pred_region
      %11 = vsyncadd [#allocation3], 0
      %s12 = sshll.u32 %s0, 4
      %s13 = int_to_ptr.hbm [resolvable:$true] %s12
      %s14 = sshll.u32 [#allocation2], 4
      %s15 = int_to_ptr.vmem [resolvable:$true] %s14
      %20 = dma.hbm_to_vmem [thread:$0]  %s13, 256, %s15, [#allocation3], 128, 128, 8
    $region5: #{tpu_custom_call.1} parent=1 // pred_fallthru
      _
    // Predicated region
    $region6: #{tpu_custom_call.1} parent=1 // pred_check
      _
    $region7: #{tpu_custom_call.1} parent=1 // pred_check_branch
      %22 = sbr.rel (0) target = $region9
    $region8: #{tpu_custom_call.1} parent=1 // pred_region
      %24 = dma.done [#allocation3], 256
    $region9: #{tpu_custom_call.1} parent=1 // pred_fallthru
      _
    %v25 = vld [vmem:[#allocation2] sm:$0xff]
    %v26 = vld [vmem:[#allocation2 + $0x8] sm:$0xff]
    %27 = vst [vmem:[#allocation5] sm:$0xff] %v25
    %28 = vst [vmem:[#allocation5 + $0x8] sm:$0xff] %v26
    // Predicated region
    $region10: #{tpu_custom_call.1} parent=1 // pred_check
      _
    $region11: #{tpu_custom_call.1} parent=1 // pred_check_branch
      %30 = sbr.rel (0) target = $region13
    $region12: #{tpu_custom_call.1} parent=1 // pred_region
      %32 = vsyncadd [#allocation4], 0
      %s33 = sshll.u32 [#allocation5], 4
      %s34 = int_to_ptr.vmem [resolvable:$true] %s33
      %s35 = sshll.u32 %s1, 4
      %s36 = int_to_ptr.hbm [resolvable:$true] %s35
      %41 = dma.vmem_to_hbm [thread:$0]  %s34, 256, %s36, [#allocation4], 128, 128, 8
    $region13: #{tpu_custom_call.1} parent=1 // pred_fallthru
      _
    // Predicated region
    $region14: #{tpu_custom_call.1} parent=1 // pred_check
      _
    $region15: #{tpu_custom_call.1} parent=1 // pred_check_branch
      %43 = sbr.rel (0) target = $region17
    $region16: #{tpu_custom_call.1} parent=1 // pred_region
      %45 = dma.done [#allocation4], 256
    $region17: #{tpu_custom_call.1} parent=1 // pred_fallthru
      _
    %46 = vsyncpa [#allocation3], 1
    %47 = vsyncpa [#allocation4], 1

</llo_original>
